<compile_context>
chip_gen: v7x
topology: tpu7x:2x2x1
jax: 0.10.0
libtpu: 0.0.40
codegen_flags: <defaults>
</compile_context>

<pallas_src>
import functools

import jax
import jax.numpy as jnp
from jax import lax
from jax.experimental import pallas as pl
from jax.experimental.pallas import tpu as pltpu

_SUBLANE = 8  # f32 sublane multiple


def _round_up(x, m):
    return ((x + m - 1) // m) * m


def _pad_axis(a, axis, mult):
    pad = (-a.shape[axis]) % mult
    if pad == 0:
        return a
    widths = [(0, 0)] * a.ndim
    widths[axis] = (0, pad)
    return jnp.pad(a, widths)


def _bottleneck_kernel(x_ref, mask_ref, w1t_ref, b1_ref, w2m_ref, b2_ref,
                       w3t_ref, b3_ref, o_ref, *, W):
    """One group of images per grid step. Channel-major layout:
         x_ref  : (Cin_pad,  L)       pixels (L = images_per_block*H*W) on lanes
         mask   : (9,        L)       precomputed halo masks, one row per 3x3 tap
         w1t    : (P_pad,    Cin_pad) conv1 1x1 weight, BN1 folded;  b1: (P_pad, 1)
         w2m    : (P_pad,    9*P_pad) conv2 3x3 weight as im2col matrix, BN2 folded
         w3t    : (Cout_pad, P_pad)   conv3 1x1 weight, BN3 folded;  b3: (Cout_pad, 1)
         o_ref  : (Cout_pad, L)
    """
    # --- conv1 (1x1) + bn1 + relu -------------------------------------------
    # No f32 copy of x: feed the native-dtype block straight into the MXU.
    h1 = jnp.dot(w1t_ref[...], x_ref[...], preferred_element_type=jnp.float32)
    h1 = jnp.maximum(h1 + b1_ref[...], 0.0)                   # (P_pad, L) f32

    L = h1.shape[1]

    # --- conv2 (3x3, stride=1, pad=1) + bn2 + relu ----------------------------
    # Build the (9*P_pad, L) im2col operand: for each tap (dy, dx) lane-roll h1
    # by the flattened pixel offset and multiply by the precomputed halo mask
    # (zeroes pixels whose source falls outside the image, including wraps
    # across image boundaries), then a single MXU dot with K = 9*P_pad.
    taps = []
    for dy in range(3):
        for dx in range(3):
            off = (dy - 1) * W + (dx - 1)          # source pixel = pixel + off
            shift = (-off) % L                     # roll so result[f] = h1[f+off]
            rolled = pltpu.roll(h1, shift=shift, axis=1) if off else h1
            m = mask_ref[pl.ds(3 * dy + dx, 1), :]               # (1, L)
            taps.append(rolled * m)
    cat = jnp.concatenate(taps, axis=0)            # (9*P_pad, L), sublane aligned

    h2 = jnp.dot(w2m_ref[...], cat, preferred_element_type=jnp.float32)
    h2 = jnp.maximum(h2 + b2_ref[...], 0.0)        # (P_pad, L)

    # --- conv3 (1x1) + bn3 + residual add + relu ------------------------------
    h3 = jnp.dot(w3t_ref[...], h2, preferred_element_type=jnp.float32)
    h3 = h3 + b3_ref[...]                          # (Cout_pad, L)
    residual = x_ref[...].astype(jnp.float32)      # re-read resident VMEM block
    o_ref[...] = jnp.maximum(h3 + residual, 0.0).astype(o_ref.dtype)


def fold_bn(gamma, beta, mean, var, eps=1e-5):
    scale = gamma / jnp.sqrt(var + eps)
    bias = beta - mean * scale
    return scale, bias


def prepare_params(w1, w2, w3, bn1, bn2, bn3):
    """Fold inference-mode BN scales into the conv weights (exact, since the
    scale is per output channel), transpose to channel-major layouts and pad
    the channel dims to the sublane multiple so taps / matmul K are aligned.
       w1: (Cin, P)   w2: (3, 3, P, P) HWIO   w3: (P, 4P)
    """
    Cin, P = w1.shape
    Cout = w3.shape[1]
    s1, b1 = fold_bn(*bn1)
    s2, b2 = fold_bn(*bn2)
    s3, b3 = fold_bn(*bn3)

    P_pad = _round_up(P, _SUBLANE)
    Cin_pad = _round_up(Cin, _SUBLANE)
    Cout_pad = _round_up(Cout, _SUBLANE)

    w1t = (w1 * s1[None, :]).T                                      # (P, Cin)
    w1t = _pad_axis(_pad_axis(w1t, 0, _SUBLANE), 1, _SUBLANE)       # (P_pad, Cin_pad)
    b1p = _pad_axis(b1.reshape(-1, 1), 0, _SUBLANE)                 # (P_pad, 1)

    # HWIO (3,3,P,P) -> (cout, dy, dx, cin), BN2 folded, both channel dims
    # padded, then reshape to the (P_pad, 9*P_pad) im2col matrix whose column
    # order (tap-major, cin-minor) matches the in-kernel tap concat.
    w2o = jnp.transpose(w2, (3, 0, 1, 2)) * s2[:, None, None, None]
    w2o = _pad_axis(_pad_axis(w2o, 0, _SUBLANE), 3, _SUBLANE)       # (P_pad,3,3,P_pad)
    w2m = w2o.reshape(P_pad, 9 * P_pad)
    b2p = _pad_axis(b2.reshape(-1, 1), 0, _SUBLANE)                 # (P_pad, 1)

    w3t = (w3 * s3[None, :]).T                                      # (Cout, P)
    w3t = _pad_axis(_pad_axis(w3t, 0, _SUBLANE), 1, _SUBLANE)       # (Cout_pad, P_pad)
    b3p = _pad_axis(b3.reshape(-1, 1), 0, _SUBLANE)                 # (Cout_pad, 1)

    meta = dict(P=P, P_pad=P_pad, Cin=Cin, Cin_pad=Cin_pad,
                Cout=Cout, Cout_pad=Cout_pad)
    return dict(w1t=w1t, b1=b1p, w2m=w2m, b2=b2p, w3t=w3t, b3=b3p, meta=meta)


def make_halo_masks(H, W, images_per_block, dtype=jnp.float32):
    """Host-precomputed (9, images_per_block*H*W) masks: mask[t, f] == 1 iff the
    source pixel of tap t=(dy,dx) for pixel f (taken modulo HW) is inside the
    image. Deletes all in-kernel iota/mod/div integer work."""
    HW = H * W
    pix = jnp.arange(HW)
    h = pix // W
    w = pix % W
    rows = []
    for dy in range(3):
        for dx in range(3):
            ok = ((h + dy - 1 >= 0) & (h + dy - 1 < H) &
                  (w + dx - 1 >= 0) & (w + dx - 1 < W))
            rows.append(ok)
    m = jnp.stack(rows, axis=0).astype(dtype)          # (9, HW)
    return jnp.tile(m, (1, images_per_block))          # (9, ipb*HW)


def _choose_images_per_block(N, HW, target_lanes=1024):
    """Pick how many images share one grid step: lane width as close to
    target_lanes as possible, a multiple of 128 (or the full extent), and
    keep >= 2 grid steps when possible so v7x's two TensorCores both get work."""
    candidates = [ipb for ipb in range(1, N + 1)
                  if N % ipb == 0 and ((ipb * HW) % 128 == 0 or ipb == N)]
    multi = [c for c in candidates if N // c >= 2]
    pool = multi if multi else candidates
    fitting = [c for c in pool if c * HW <= max(target_lanes, HW)]
    return max(fitting) if fitting else min(pool)


def bottleneck_forward(x_nchw, params, images_per_block=None):
    N, Cin, H, W = x_nchw.shape
    meta = params["meta"]
    assert Cin == meta["Cin"]
    assert meta["Cin"] == meta["Cout"], \
        "downsample=None path requires inplanes == planes * 4"
    HW = H * W
    Cin_pad, Cout_pad = meta["Cin_pad"], meta["Cout_pad"]

    if images_per_block is None:
        images_per_block = _choose_images_per_block(N, HW)
    assert N % images_per_block == 0
    grid_n = N // images_per_block
    L = images_per_block * HW

    # NCHW -> channel-major (Cin_pad, N*H*W): pixels land on the 128-lane axis;
    # channel axis zero-padded to a sublane multiple.
    x_cm = jnp.transpose(x_nchw, (1, 0, 2, 3)).reshape(Cin, N * HW)
    if Cin_pad > Cin:
        x_cm = jnp.pad(x_cm, ((0, Cin_pad - Cin), (0, 0)))

    masks = make_halo_masks(H, W, images_per_block, dtype=jnp.float32)

    kernel = functools.partial(_bottleneck_kernel, W=W)
    full = lambda a: pl.BlockSpec(a.shape, lambda n: (0, 0))

    out_cm = pl.pallas_call(
        kernel,
        out_shape=jax.ShapeDtypeStruct((Cout_pad, N * HW), x_nchw.dtype),
        grid=(grid_n,),
        in_specs=[pl.BlockSpec((Cin_pad, L), lambda n: (0, n)),
                  full(masks),
                  full(params["w1t"]), full(params["b1"]),
                  full(params["w2m"]), full(params["b2"]),
                  full(params["w3t"]), full(params["b3"])],
        out_specs=pl.BlockSpec((Cout_pad, L), lambda n: (0, n)),
        compiler_params=pltpu.CompilerParams(
            dimension_semantics=("parallel",)),
    )(x_cm, masks, params["w1t"], params["b1"], params["w2m"], params["b2"],
      params["w3t"], params["b3"])

    # drop channel padding, channel-major -> NCHW
    out_cm = out_cm[:meta["Cout"], :]
    return jnp.transpose(out_cm.reshape(meta["Cout"], N, H, W), (1, 0, 2, 3))


if __name__ == "__main__":
    key = jax.random.PRNGKey(0)
    N, H, W = 2, 16, 16
    planes = 4
    inplanes = planes * 4   # downsample=None in forward => inplanes == planes*expansion

    keys = jax.random.split(key, 16)
    # PyTorch-style NCHW input.
    x_nchw = jax.random.normal(keys[0], (N, inplanes, H, W), jnp.float32)

    # Synthetic conv weights (channel-matmul / HWIO layouts).
    w1 = 0.1 * jax.random.normal(keys[1], (inplanes, planes), jnp.float32)       # (Cin, P)
    w2 = 0.1 * jax.random.normal(keys[2], (3, 3, planes, planes), jnp.float32)   # HWIO
    w3 = 0.1 * jax.random.normal(keys[3], (planes, 4 * planes), jnp.float32)     # (P, 4P)

    def rand_bn(kg, kb, km, kv, c):
        gamma = 1.0 + 0.1 * jax.random.normal(kg, (c,), jnp.float32)
        beta = 0.1 * jax.random.normal(kb, (c,), jnp.float32)
        mean = 0.1 * jax.random.normal(km, (c,), jnp.float32)
        var = jnp.abs(jax.random.normal(kv, (c,), jnp.float32)) + 0.5
        return gamma, beta, mean, var

    bn1 = rand_bn(keys[4], keys[5], keys[6], keys[7], planes)
    bn2 = rand_bn(keys[8], keys[9], keys[10], keys[11], planes)
    bn3 = rand_bn(keys[12], keys[13], keys[14], keys[15], 4 * planes)

    params = prepare_params(w1, w2, w3, bn1, bn2, bn3)

    out_nchw = jax.block_until_ready(bottleneck_forward(x_nchw, params))

    # Pure-JAX reference (same inference-mode BN fold), computed in NHWC.
    s1, b1 = fold_bn(*bn1)
    s2, b2 = fold_bn(*bn2)
    s3, b3 = fold_bn(*bn3)
    x_nhwc = jnp.transpose(x_nchw, (0, 2, 3, 1))

    def ref(x):
        h = jnp.einsum("nhwc,cp->nhwp", x, w1)
        h = jnp.maximum(h * s1 + b1, 0.0)
        h = lax.conv_general_dilated(h, w2, (1, 1), ((1, 1), (1, 1)),
                                     dimension_numbers=("NHWC", "HWIO", "NHWC"))
        h = jnp.maximum(h * s2 + b2, 0.0)
        h = jnp.einsum("nhwp,pq->nhwq", h, w3)
        h = h * s3 + b3
        return jnp.maximum(h + x, 0.0)

    expected_nhwc = ref(x_nhwc)
    out_nhwc = jnp.transpose(out_nchw, (0, 2, 3, 1))
    err = float(jnp.max(jnp.abs(out_nhwc - expected_nhwc)))
    assert jnp.allclose(out_nhwc, expected_nhwc, atol=1e-4, rtol=1e-4), \
        f"max abs err {err}"
    print("KERNEL_OK")
</pallas_src>

<mosaic_0001>
module attributes {stable_mosaic.version = 11 : i64} {
  func.func @_bottleneck_kernel(%arg0: i32, %arg1: memref<16x256xf32, #tpu.memory_space<vmem>>, %arg2: memref<9x256xf32, #tpu.memory_space<vmem>>, %arg3: memref<8x16xf32, #tpu.memory_space<vmem>>, %arg4: memref<8x1xf32, #tpu.memory_space<vmem>>, %arg5: memref<8x72xf32, #tpu.memory_space<vmem>>, %arg6: memref<8x1xf32, #tpu.memory_space<vmem>>, %arg7: memref<16x8xf32, #tpu.memory_space<vmem>>, %arg8: memref<16x1xf32, #tpu.memory_space<vmem>>, %arg9: memref<16x256xf32, #tpu.memory_space<vmem>>) attributes {dimension_semantics = [#tpu.dimension_semantics<parallel>], iteration_bounds = array<i64: 2>, scalar_prefetch = 0 : i64, scratch_operands = 0 : i64, tpu.core_type = #tpu.core_type<tc>, window_params = [{transform_indices = @transform_0, window_bounds = array<i64: 16, 256>}, {pipeline_mode = #tpu.pipeline_mode<synchronous>, transform_indices = @transform_1, window_bounds = array<i64: 9, 256>}, {pipeline_mode = #tpu.pipeline_mode<synchronous>, transform_indices = @transform_2, window_bounds = array<i64: 8, 16>}, {pipeline_mode = #tpu.pipeline_mode<synchronous>, transform_indices = @transform_3, window_bounds = array<i64: 8, 1>}, {pipeline_mode = #tpu.pipeline_mode<synchronous>, transform_indices = @transform_4, window_bounds = array<i64: 8, 72>}, {pipeline_mode = #tpu.pipeline_mode<synchronous>, transform_indices = @transform_5, window_bounds = array<i64: 8, 1>}, {pipeline_mode = #tpu.pipeline_mode<synchronous>, transform_indices = @transform_6, window_bounds = array<i64: 16, 8>}, {pipeline_mode = #tpu.pipeline_mode<synchronous>, transform_indices = @transform_7, window_bounds = array<i64: 16, 1>}, {transform_indices = @transform_8, window_bounds = array<i64: 16, 256>}]} {
    %c0 = arith.constant 0 : index
    %c0_0 = arith.constant 0 : index
    %0 = vector.load %arg3[%c0, %c0_0] : memref<8x16xf32, #tpu.memory_space<vmem>>, vector<8x16xf32>
    %c0_1 = arith.constant 0 : index
    %c0_2 = arith.constant 0 : index
    %1 = vector.load %arg1[%c0_1, %c0_2] : memref<16x256xf32, #tpu.memory_space<vmem>>, vector<16x256xf32>
    %cst = arith.constant dense<0.000000e+00> : vector<8x256xf32>
    %2 = tpu.matmul %0, %1, %cst {dimension_numbers = #tpu.dot_dimension_numbers<[1], [0], [0], [1], [0, 0, 1, 1], [], []>} : vector<8x16xf32>, vector<16x256xf32>, vector<8x256xf32> -> vector<8x256xf32>
    %c0_3 = arith.constant 0 : index
    %c0_4 = arith.constant 0 : index
    %3 = vector.load %arg4[%c0_3, %c0_4] : memref<8x1xf32, #tpu.memory_space<vmem>>, vector<8x1xf32>
    %4 = vector.broadcast %3 : vector<8x1xf32> to vector<8x256xf32>
    %5 = arith.addf %2, %4 : vector<8x256xf32>
    %cst_5 = arith.constant 0.000000e+00 : f32
    %6 = vector.broadcast %cst_5 : f32 to vector<8x256xf32>
    %7 = arith.maximumf %5, %6 : vector<8x256xf32>
    %c17_i32 = arith.constant 17 : i32
    %8 = tpu.dynamic_rotate %7 by %c17_i32 dim 1 : vector<8x256xf32>, i32 -> vector<8x256xf32>
    %c0_6 = arith.constant 0 : index
    %c0_7 = arith.constant 0 : index
    %9 = vector.load %arg2[%c0_6, %c0_7] : memref<9x256xf32, #tpu.memory_space<vmem>>, vector<1x256xf32>
    %10 = vector.broadcast %9 : vector<1x256xf32> to vector<8x256xf32>
    %11 = arith.mulf %8, %10 : vector<8x256xf32>
    %c16_i32 = arith.constant 16 : i32
    %12 = tpu.dynamic_rotate %7 by %c16_i32 dim 1 : vector<8x256xf32>, i32 -> vector<8x256xf32>
    %c1 = arith.constant 1 : index
    %c0_8 = arith.constant 0 : index
    %13 = vector.load %arg2[%c1, %c0_8] : memref<9x256xf32, #tpu.memory_space<vmem>>, vector<1x256xf32>
    %14 = vector.broadcast %13 : vector<1x256xf32> to vector<8x256xf32>
    %15 = arith.mulf %12, %14 : vector<8x256xf32>
    %c15_i32 = arith.constant 15 : i32
    %16 = tpu.dynamic_rotate %7 by %c15_i32 dim 1 : vector<8x256xf32>, i32 -> vector<8x256xf32>
    %c2 = arith.constant 2 : index
    %c0_9 = arith.constant 0 : index
    %17 = vector.load %arg2[%c2, %c0_9] : memref<9x256xf32, #tpu.memory_space<vmem>>, vector<1x256xf32>
    %18 = vector.broadcast %17 : vector<1x256xf32> to vector<8x256xf32>
    %19 = arith.mulf %16, %18 : vector<8x256xf32>
    %c1_i32 = arith.constant 1 : i32
    %20 = tpu.dynamic_rotate %7 by %c1_i32 dim 1 : vector<8x256xf32>, i32 -> vector<8x256xf32>
    %c3 = arith.constant 3 : index
    %c0_10 = arith.constant 0 : index
    %21 = vector.load %arg2[%c3, %c0_10] : memref<9x256xf32, #tpu.memory_space<vmem>>, vector<1x256xf32>
    %22 = vector.broadcast %21 : vector<1x256xf32> to vector<8x256xf32>
    %23 = arith.mulf %20, %22 : vector<8x256xf32>
    %c4 = arith.constant 4 : index
    %c0_11 = arith.constant 0 : index
    %24 = vector.load %arg2[%c4, %c0_11] : memref<9x256xf32, #tpu.memory_space<vmem>>, vector<1x256xf32>
    %25 = vector.broadcast %24 : vector<1x256xf32> to vector<8x256xf32>
    %26 = arith.mulf %7, %25 : vector<8x256xf32>
    %c255_i32 = arith.constant 255 : i32
    %27 = tpu.dynamic_rotate %7 by %c255_i32 dim 1 : vector<8x256xf32>, i32 -> vector<8x256xf32>
    %c5 = arith.constant 5 : index
    %c0_12 = arith.constant 0 : index
    %28 = vector.load %arg2[%c5, %c0_12] : memref<9x256xf32, #tpu.memory_space<vmem>>, vector<1x256xf32>
    %29 = vector.broadcast %28 : vector<1x256xf32> to vector<8x256xf32>
    %30 = arith.mulf %27, %29 : vector<8x256xf32>
    %c241_i32 = arith.constant 241 : i32
    %31 = tpu.dynamic_rotate %7 by %c241_i32 dim 1 : vector<8x256xf32>, i32 -> vector<8x256xf32>
    %c6 = arith.constant 6 : index
    %c0_13 = arith.constant 0 : index
    %32 = vector.load %arg2[%c6, %c0_13] : memref<9x256xf32, #tpu.memory_space<vmem>>, vector<1x256xf32>
    %33 = vector.broadcast %32 : vector<1x256xf32> to vector<8x256xf32>
    %34 = arith.mulf %31, %33 : vector<8x256xf32>
    %c240_i32 = arith.constant 240 : i32
    %35 = tpu.dynamic_rotate %7 by %c240_i32 dim 1 : vector<8x256xf32>, i32 -> vector<8x256xf32>
    %c7 = arith.constant 7 : index
    %c0_14 = arith.constant 0 : index
    %36 = vector.load %arg2[%c7, %c0_14] : memref<9x256xf32, #tpu.memory_space<vmem>>, vector<1x256xf32>
    %37 = vector.broadcast %36 : vector<1x256xf32> to vector<8x256xf32>
    %38 = arith.mulf %35, %37 : vector<8x256xf32>
    %c239_i32 = arith.constant 239 : i32
    %39 = tpu.dynamic_rotate %7 by %c239_i32 dim 1 : vector<8x256xf32>, i32 -> vector<8x256xf32>
    %c8 = arith.constant 8 : index
    %c0_15 = arith.constant 0 : index
    %40 = vector.load %arg2[%c8, %c0_15] : memref<9x256xf32, #tpu.memory_space<vmem>>, vector<1x256xf32>
    %41 = vector.broadcast %40 : vector<1x256xf32> to vector<8x256xf32>
    %42 = arith.mulf %39, %41 : vector<8x256xf32>
    %43 = tpu.concatenate %11, %15, %19, %23, %26, %30, %34, %38, %42 in 0 : vector<8x256xf32>, vector<8x256xf32>, vector<8x256xf32>, vector<8x256xf32>, vector<8x256xf32>, vector<8x256xf32>, vector<8x256xf32>, vector<8x256xf32>, vector<8x256xf32> -> vector<72x256xf32>
    %c0_16 = arith.constant 0 : index
    %c0_17 = arith.constant 0 : index
    %44 = vector.load %arg5[%c0_16, %c0_17] : memref<8x72xf32, #tpu.memory_space<vmem>>, vector<8x72xf32>
    %cst_18 = arith.constant dense<0.000000e+00> : vector<8x256xf32>
    %45 = tpu.matmul %44, %43, %cst_18 {dimension_numbers = #tpu.dot_dimension_numbers<[1], [0], [0], [1], [0, 0, 1, 1], [], []>} : vector<8x72xf32>, vector<72x256xf32>, vector<8x256xf32> -> vector<8x256xf32>
    %c0_19 = arith.constant 0 : index
    %c0_20 = arith.constant 0 : index
    %46 = vector.load %arg6[%c0_19, %c0_20] : memref<8x1xf32, #tpu.memory_space<vmem>>, vector<8x1xf32>
    %47 = vector.broadcast %46 : vector<8x1xf32> to vector<8x256xf32>
    %48 = arith.addf %45, %47 : vector<8x256xf32>
    %cst_21 = arith.constant 0.000000e+00 : f32
    %49 = vector.broadcast %cst_21 : f32 to vector<8x256xf32>
    %50 = arith.maximumf %48, %49 : vector<8x256xf32>
    %c0_22 = arith.constant 0 : index
    %c0_23 = arith.constant 0 : index
    %51 = vector.load %arg7[%c0_22, %c0_23] : memref<16x8xf32, #tpu.memory_space<vmem>>, vector<16x8xf32>
    %cst_24 = arith.constant dense<0.000000e+00> : vector<16x256xf32>
    %52 = tpu.matmul %51, %50, %cst_24 {dimension_numbers = #tpu.dot_dimension_numbers<[1], [0], [0], [1], [0, 0, 1, 1], [], []>} : vector<16x8xf32>, vector<8x256xf32>, vector<16x256xf32> -> vector<16x256xf32>
    %c0_25 = arith.constant 0 : index
    %c0_26 = arith.constant 0 : index
    %53 = vector.load %arg8[%c0_25, %c0_26] : memref<16x1xf32, #tpu.memory_space<vmem>>, vector<16x1xf32>
    %54 = vector.broadcast %53 : vector<16x1xf32> to vector<16x256xf32>
    %55 = arith.addf %52, %54 : vector<16x256xf32>
    %c0_27 = arith.constant 0 : index
    %c0_28 = arith.constant 0 : index
    %56 = vector.load %arg1[%c0_27, %c0_28] : memref<16x256xf32, #tpu.memory_space<vmem>>, vector<16x256xf32>
    %57 = arith.addf %55, %56 : vector<16x256xf32>
    %cst_29 = arith.constant 0.000000e+00 : f32
    %58 = vector.broadcast %cst_29 : f32 to vector<16x256xf32>
    %59 = arith.maximumf %57, %58 : vector<16x256xf32>
    %c0_30 = arith.constant 0 : index
    %c0_31 = arith.constant 0 : index
    %60 = vector.load %arg9[%c0_30, %c0_31] : memref<16x256xf32, #tpu.memory_space<vmem>>, vector<16x256xf32>
    tpu.vector_store %arg9[%c0_30, %c0_31], %59 {strides = array<i32>} : memref<16x256xf32, #tpu.memory_space<vmem>>, vector<16x256xf32>,
    return
  }
  func.func @transform_0(%arg0: i32) -> (i32, i32) {
    %c0_i32 = arith.constant 0 : i32
    %c0_i32_0 = arith.constant 0 : i32
    return %c0_i32, %arg0 : i32, i32
  }
  func.func @transform_1(%arg0: i32) -> (i32, i32) {
    %c0_i32 = arith.constant 0 : i32
    %c0_i32_0 = arith.constant 0 : i32
    %c0_i32_1 = arith.constant 0 : i32
    return %c0_i32, %c0_i32_0 : i32, i32
  }
  func.func @transform_2(%arg0: i32) -> (i32, i32) {
    %c0_i32 = arith.constant 0 : i32
    %c0_i32_0 = arith.constant 0 : i32
    %c0_i32_1 = arith.constant 0 : i32
    return %c0_i32, %c0_i32_0 : i32, i32
  }
  func.func @transform_3(%arg0: i32) -> (i32, i32) {
    %c0_i32 = arith.constant 0 : i32
    %c0_i32_0 = arith.constant 0 : i32
    %c0_i32_1 = arith.constant 0 : i32
    return %c0_i32, %c0_i32_0 : i32, i32
  }
  func.func @transform_4(%arg0: i32) -> (i32, i32) {
    %c0_i32 = arith.constant 0 : i32
    %c0_i32_0 = arith.constant 0 : i32
    %c0_i32_1 = arith.constant 0 : i32
    return %c0_i32, %c0_i32_0 : i32, i32
  }
  func.func @transform_5(%arg0: i32) -> (i32, i32) {
    %c0_i32 = arith.constant 0 : i32
    %c0_i32_0 = arith.constant 0 : i32
    %c0_i32_1 = arith.constant 0 : i32
    return %c0_i32, %c0_i32_0 : i32, i32
  }
  func.func @transform_6(%arg0: i32) -> (i32, i32) {
    %c0_i32 = arith.constant 0 : i32
    %c0_i32_0 = arith.constant 0 : i32
    %c0_i32_1 = arith.constant 0 : i32
    return %c0_i32, %c0_i32_0 : i32, i32
  }
  func.func @transform_7(%arg0: i32) -> (i32, i32) {
    %c0_i32 = arith.constant 0 : i32
    %c0_i32_0 = arith.constant 0 : i32
    %c0_i32_1 = arith.constant 0 : i32
    return %c0_i32, %c0_i32_0 : i32, i32
  }
  func.func @transform_8(%arg0: i32) -> (i32, i32) {
    %c0_i32 = arith.constant 0 : i32
    %c0_i32_0 = arith.constant 0 : i32
    return %c0_i32, %arg0 : i32, i32
  }
}

</mosaic_0001>

<llo_original>
// kernel: tpu_custom_call.1
$region0: #{tpu_custom_call.1}
  #allocation0 [shape = 'u32[]', space=smem, size = 0x4, offset = 0x4, fixed_abs, tag = 'smem constant byte address 0x4 - core index']
  #allocation1 [shape = 'u32[144,128]{1,0:T(1,128)}', space=vmem, size = 0x12000, scoped, tag = 'internal scratch']
  %s0 = inlined_call_operand.hbm [shape: f32[16,512], index: 0, kind: input, shape index: {}]
  %s1 = inlined_call_operand.vmem [shape: f32[9,256], index: 1, kind: input, shape index: {}]
  %s2 = inlined_call_operand.vmem [shape: f32[8,16], index: 2, kind: input, shape index: {}]
  %s3 = inlined_call_operand.vmem [shape: f32[8,1], index: 3, kind: input, shape index: {}]
  %s4 = inlined_call_operand.vmem [shape: f32[8,72], index: 4, kind: input, shape index: {}]
  %s5 = inlined_call_operand.vmem [shape: f32[8,1], index: 5, kind: input, shape index: {}]
  %s6 = inlined_call_operand.vmem [shape: f32[16,8], index: 6, kind: input, shape index: {}]
  %s7 = inlined_call_operand.vmem [shape: f32[16,1], index: 7, kind: input, shape index: {}]
  %s8 = inlined_call_operand.hbm [shape: f32[16,512], index: 8, kind: output, shape index: {}]
  %s9 = sld [smem:[#allocation0]]
  $region69: #{tpu_custom_call.1} parent=0
    _
  %s11 = ssub.s32 1, %s9
  %s12 = scalar_select 0, %s11, %s9
  $region1: #{tpu_custom_call.1} parent=0
    #allocation2 [shape = 'u8[32768]{0}', space=vmem, size = 0x8000, scoped, tag = 'input window, operand 0']
    #allocation3 [shape = 's32[2]{0}', space=sflag, size = 0x8, scoped, tag = 'scoped memory for tpu_custom_call.1']
    #allocation4 [shape = 's32[2]{0}', space=sflag, size = 0x8, scoped, tag = 'scoped memory for tpu_custom_call.1']
    #allocation5 [shape = 'u8[32768]{0}', space=vmem, size = 0x8000, scoped, tag = 'output window, operand 0']
    %13 = vsyncpa [#allocation3], 0
    %s14 = scalar_lea.sflag [#allocation3], 1
    %15 = vsyncpa %s14, 0
    %16 = vsyncpa [#allocation4], 0
    %s17 = scalar_lea.sflag [#allocation4], 1
    %18 = vsyncpa %s17, 0
    loop: start=0, step=1, limit=4
    $region2: #{tpu_custom_call.1} parent=1 // loop_pre_header
      _
    $region3: #{tpu_custom_call.1} parent=1 // loop_header
      %s20 = sphi 0, %s24
      %p21 = scmp.ge.s32.totalorder %s20, 4
      %s30 = sphi 0, %s32
      %s33 = sphi 0, %s30
      %s34 = sphi 0, %s33
      %s50 = sphi 0, %s34
      %s54 = sphi 0, %s54
      %s56 = sphi 0, %s54
      %s57 = sphi 0, %s56
      %s71 = sphi 0, %s57
      %s75 = sphi 0, %s75
      %s77 = sphi 0, %s75
      %s78 = sphi 0, %s77
      %s92 = sphi 0, %s78
      %s96 = sphi 0, %s96
      %s98 = sphi 0, %s96
      %s99 = sphi 0, %s98
      %s113 = sphi 0, %s99
      %s117 = sphi 0, %s117
      %s119 = sphi 0, %s117
      %s120 = sphi 0, %s119
      %s134 = sphi 0, %s120
      %s138 = sphi 0, %s138
      %s140 = sphi 0, %s138
      %s141 = sphi 0, %s140
      %s155 = sphi 0, %s141
      %s159 = sphi 0, %s159
      %s161 = sphi 0, %s159
      %s162 = sphi 0, %s161
      %s176 = sphi 0, %s162
      %s180 = sphi 0, %s180
      %s182 = sphi 0, %s180
      %s183 = sphi 0, %s182
      %s197 = sphi 0, %s183
      %s203 = sphi 0, %s205
      %s206 = sphi 0, %s203
      %s207 = sphi 0, %s206
      %s223 = sphi 0, %s207
    $region4: #{tpu_custom_call.1} parent=1 // loop_header_branch
      %23 = sbr.rel (%p21) target = $region8
    $region5: #{tpu_custom_call.1} parent=1 // loop_body
      %s25 = ssub.s32 %s20, 1
      %s26 = ssub.s32 %s20, 2
      %s27 = sadd.s32 %s20, 1
      %s28 = ssub.s32 %s20, %s27
      %p29 = scmp.eq.s32.totalorder %s28, 0
      %s31 = sadd.s32 %s30, 1
      %s32 = scalar_select %p29, %s30, %s31
      %p35 = pneg %p29
      %p36 = scmp.eq.s32.totalorder %s20, 1
      %p37 = por %p35, %p36
      %p38 = scmp.ne.s32.totalorder %s30, %s33
      %p39 = scmp.eq.s32.totalorder %s20, 0
      %p40 = por %p38, %p39
      %p41 = scmp.ne.s32.totalorder %s30, %s33
      %p42 = scmp.eq.s32.totalorder %s25, 1
      %p43 = por %p41, %p42
      %p44 = scmp.ne.s32.totalorder %s33, %s34
      %p45 = scmp.eq.s32.totalorder %s25, 0
      %p46 = por %p44, %p45
      %p47 = scmp.ne.s32.totalorder %s33, %s34
      %p48 = scmp.eq.s32.totalorder %s26, 1
      %p49 = por %p47, %p48
      %p51 = scmp.ne.s32.totalorder %s34, %s50
      %p52 = scmp.eq.s32.totalorder %s26, 0
      %p53 = por %p51, %p52
      %s55 = sadd.s32 %s54, 1
      %p58 = scmp.eq.s32.totalorder %s20, 1
      %p59 = scmp.ne.s32.totalorder %s54, %s56
      %p60 = scmp.eq.s32.totalorder %s20, 0
      %p61 = por %p59, %p60
      %p62 = scmp.ne.s32.totalorder %s54, %s56
      %p63 = scmp.eq.s32.totalorder %s25, 1
      %p64 = por %p62, %p63
      %p65 = scmp.ne.s32.totalorder %s56, %s57
      %p66 = scmp.eq.s32.totalorder %s25, 0
      %p67 = por %p65, %p66
      %p68 = scmp.ne.s32.totalorder %s56, %s57
      %p69 = scmp.eq.s32.totalorder %s26, 1
      %p70 = por %p68, %p69
      %p72 = scmp.ne.s32.totalorder %s57, %s71
      %p73 = scmp.eq.s32.totalorder %s26, 0
      %p74 = por %p72, %p73
      %s76 = sadd.s32 %s75, 1
      %p79 = scmp.eq.s32.totalorder %s20, 1
      %p80 = scmp.ne.s32.totalorder %s75, %s77
      %p81 = scmp.eq.s32.totalorder %s20, 0
      %p82 = por %p80, %p81
      %p83 = scmp.ne.s32.totalorder %s75, %s77
      %p84 = scmp.eq.s32.totalorder %s25, 1
      %p85 = por %p83, %p84
      %p86 = scmp.ne.s32.totalorder %s77, %s78
      %p87 = scmp.eq.s32.totalorder %s25, 0
      %p88 = por %p86, %p87
      %p89 = scmp.ne.s32.totalorder %s77, %s78
      %p90 = scmp.eq.s32.totalorder %s26, 1
      %p91 = por %p89, %p90
      %p93 = scmp.ne.s32.totalorder %s78, %s92
      %p94 = scmp.eq.s32.totalorder %s26, 0
      %p95 = por %p93, %p94
      %s97 = sadd.s32 %s96, 1
      %p100 = scmp.eq.s32.totalorder %s20, 1
      %p101 = scmp.ne.s32.totalorder %s96, %s98
      %p102 = scmp.eq.s32.totalorder %s20, 0
      %p103 = por %p101, %p102
      %p104 = scmp.ne.s32.totalorder %s96, %s98
      %p105 = scmp.eq.s32.totalorder %s25, 1
      %p106 = por %p104, %p105
      %p107 = scmp.ne.s32.totalorder %s98, %s99
      %p108 = scmp.eq.s32.totalorder %s25, 0
      %p109 = por %p107, %p108
      %p110 = scmp.ne.s32.totalorder %s98, %s99
      %p111 = scmp.eq.s32.totalorder %s26, 1
      %p112 = por %p110, %p111
      %p114 = scmp.ne.s32.totalorder %s99, %s113
      %p115 = scmp.eq.s32.totalorder %s26, 0
      %p116 = por %p114, %p115
      %s118 = sadd.s32 %s117, 1
      %p121 = scmp.eq.s32.totalorder %s20, 1
      %p122 = scmp.ne.s32.totalorder %s117, %s119
      %p123 = scmp.eq.s32.totalorder %s20, 0
      %p124 = por %p122, %p123
      %p125 = scmp.ne.s32.totalorder %s117, %s119
      %p126 = scmp.eq.s32.totalorder %s25, 1
      %p127 = por %p125, %p126
      %p128 = scmp.ne.s32.totalorder %s119, %s120
      %p129 = scmp.eq.s32.totalorder %s25, 0
      %p130 = por %p128, %p129
      %p131 = scmp.ne.s32.totalorder %s119, %s120
      %p132 = scmp.eq.s32.totalorder %s26, 1
      %p133 = por %p131, %p132
      %p135 = scmp.ne.s32.totalorder %s120, %s134
      %p136 = scmp.eq.s32.totalorder %s26, 0
      %p137 = por %p135, %p136
      %s139 = sadd.s32 %s138, 1
      %p142 = scmp.eq.s32.totalorder %s20, 1
      %p143 = scmp.ne.s32.totalorder %s138, %s140
      %p144 = scmp.eq.s32.totalorder %s20, 0
      %p145 = por %p143, %p144
      %p146 = scmp.ne.s32.totalorder %s138, %s140
      %p147 = scmp.eq.s32.totalorder %s25, 1
      %p148 = por %p146, %p147
      %p149 = scmp.ne.s32.totalorder %s140, %s141
      %p150 = scmp.eq.s32.totalorder %s25, 0
      %p151 = por %p149, %p150
      %p152 = scmp.ne.s32.totalorder %s140, %s141
      %p153 = scmp.eq.s32.totalorder %s26, 1
      %p154 = por %p152, %p153
      %p156 = scmp.ne.s32.totalorder %s141, %s155
      %p157 = scmp.eq.s32.totalorder %s26, 0
      %p158 = por %p156, %p157
      %s160 = sadd.s32 %s159, 1
      %p163 = scmp.eq.s32.totalorder %s20, 1
      %p164 = scmp.ne.s32.totalorder %s159, %s161
      %p165 = scmp.eq.s32.totalorder %s20, 0
      %p166 = por %p164, %p165
      %p167 = scmp.ne.s32.totalorder %s159, %s161
      %p168 = scmp.eq.s32.totalorder %s25, 1
      %p169 = por %p167, %p168
      %p170 = scmp.ne.s32.totalorder %s161, %s162
      %p171 = scmp.eq.s32.totalorder %s25, 0
      %p172 = por %p170, %p171
      %p173 = scmp.ne.s32.totalorder %s161, %s162
      %p174 = scmp.eq.s32.totalorder %s26, 1
      %p175 = por %p173, %p174
      %p177 = scmp.ne.s32.totalorder %s162, %s176
      %p178 = scmp.eq.s32.totalorder %s26, 0
      %p179 = por %p177, %p178
      %s181 = sadd.s32 %s180, 1
      %p184 = scmp.eq.s32.totalorder %s20, 1
      %p185 = scmp.ne.s32.totalorder %s180, %s182
      %p186 = scmp.eq.s32.totalorder %s20, 0
      %p187 = por %p185, %p186
      %p188 = scmp.ne.s32.totalorder %s180, %s182
      %p189 = scmp.eq.s32.totalorder %s25, 1
      %p190 = por %p188, %p189
      %p191 = scmp.ne.s32.totalorder %s182, %s183
      %p192 = scmp.eq.s32.totalorder %s25, 0
      %p193 = por %p191, %p192
      %p194 = scmp.ne.s32.totalorder %s182, %s183
      %p195 = scmp.eq.s32.totalorder %s26, 1
      %p196 = por %p194, %p195
      %p198 = scmp.ne.s32.totalorder %s183, %s197
      %p199 = scmp.eq.s32.totalorder %s26, 0
      %p200 = por %p198, %p199
      %s201 = ssub.s32 %s20, %s27
      %p202 = scmp.eq.s32.totalorder %s201, 0
      %s204 = sadd.s32 %s203, 1
      %s205 = scalar_select %p202, %s203, %s204
      %p208 = pneg %p202
      %p209 = scmp.eq.s32.totalorder %s20, 1
      %p210 = por %p208, %p209
      %p211 = scmp.ne.s32.totalorder %s203, %s206
      %p212 = scmp.eq.s32.totalorder %s20, 0
      %p213 = por %p211, %p212
      %p214 = scmp.ne.s32.totalorder %s203, %s206
      %p215 = scmp.eq.s32.totalorder %s25, 1
      %p216 = por %p214, %p215
      %p217 = scmp.ne.s32.totalorder %s206, %s207
      %p218 = scmp.eq.s32.totalorder %s25, 0
      %p219 = por %p217, %p218
      %p220 = scmp.ne.s32.totalorder %s206, %s207
      %p221 = scmp.eq.s32.totalorder %s26, 1
      %p222 = por %p220, %p221
      %p224 = scmp.ne.s32.totalorder %s207, %s223
      %p225 = scmp.eq.s32.totalorder %s26, 0
      %p226 = por %p224, %p225
      %p227 = scmp.le.s32.totalorder 1, %s20
      %p228 = scmp.lt.s32.totalorder %s20, 3
      %p229 = pnand %p227, %p228
      %p230 = pneg %p229
      // Predicated region
      $region9: #{tpu_custom_call.1} parent=5 // pred_check
        _
      $region10: #{tpu_custom_call.1} parent=5 // pred_check_branch
        %232 = sbr.rel (%p229) target = $region12
      $region11: #{tpu_custom_call.1} parent=5 // pred_region
        %s233 = ssub.s32 %s20, 1
        // Predicated region
        $region13: #{tpu_custom_call.1} parent=11 // pred_check
          %p234 = pneg %p67
        $region14: #{tpu_custom_call.1} parent=11 // pred_check_branch
          %236 = sbr.rel (%p234) target = $region16
        $region15: #{tpu_custom_call.1} parent=11 // pred_region
          _
        $region16: #{tpu_custom_call.1} parent=11 // pred_fallthru
          _
        // Predicated region
        $region17: #{tpu_custom_call.1} parent=11 // pred_check
          %p237 = pneg %p88
        $region18: #{tpu_custom_call.1} parent=11 // pred_check_branch
          %239 = sbr.rel (%p237) target = $region20
        $region19: #{tpu_custom_call.1} parent=11 // pred_region
          _
        $region20: #{tpu_custom_call.1} parent=11 // pred_fallthru
          _
        // Predicated region
        $region21: #{tpu_custom_call.1} parent=11 // pred_check
          %p240 = pneg %p109
        $region22: #{tpu_custom_call.1} parent=11 // pred_check_branch
          %242 = sbr.rel (%p240) target = $region24
        $region23: #{tpu_custom_call.1} parent=11 // pred_region
          _
        $region24: #{tpu_custom_call.1} parent=11 // pred_fallthru
          _
        // Predicated region
        $region25: #{tpu_custom_call.1} parent=11 // pred_check
          %p243 = pneg %p130
        $region26: #{tpu_custom_call.1} parent=11 // pred_check_branch
          %245 = sbr.rel (%p243) target = $region28
        $region27: #{tpu_custom_call.1} parent=11 // pred_region
          _
        $region28: #{tpu_custom_call.1} parent=11 // pred_fallthru
          _
        // Predicated region
        $region29: #{tpu_custom_call.1} parent=11 // pred_check
          %p246 = pneg %p151
        $region30: #{tpu_custom_call.1} parent=11 // pred_check_branch
          %248 = sbr.rel (%p246) target = $region32
        $region31: #{tpu_custom_call.1} parent=11 // pred_region
          _
        $region32: #{tpu_custom_call.1} parent=11 // pred_fallthru
          _
        // Predicated region
        $region33: #{tpu_custom_call.1} parent=11 // pred_check
          %p249 = pneg %p172
        $region34: #{tpu_custom_call.1} parent=11 // pred_check_branch
          %251 = sbr.rel (%p249) target = $region36
        $region35: #{tpu_custom_call.1} parent=11 // pred_region
          _
        $region36: #{tpu_custom_call.1} parent=11 // pred_fallthru
          _
        // Predicated region
        $region37: #{tpu_custom_call.1} parent=11 // pred_check
          %p252 = pneg %p193
        $region38: #{tpu_custom_call.1} parent=11 // pred_check_branch
          %254 = sbr.rel (%p252) target = $region40
        $region39: #{tpu_custom_call.1} parent=11 // pred_region
          _
        $region40: #{tpu_custom_call.1} parent=11 // pred_fallthru
          _
      $region12: #{tpu_custom_call.1} parent=5 // pred_fallthru
        _
      %p255 = scmp.lt.s32.totalorder %s20, 2
      // Predicated region
      $region41: #{tpu_custom_call.1} parent=5 // pred_check
        %p256 = pneg %p255
      $region42: #{tpu_custom_call.1} parent=5 // pred_check_branch
        %258 = sbr.rel (%p256) target = $region44
      $region43: #{tpu_custom_call.1} parent=5 // pred_region
        // Predicated region
        $region45: #{tpu_custom_call.1} parent=43 // pred_check
          %p259 = pneg %p40
        $region46: #{tpu_custom_call.1} parent=43 // pred_check_branch
          %261 = sbr.rel (%p259) target = $region48
        $region47: #{tpu_custom_call.1} parent=43 // pred_region
          %s262 = sand.u32 %s30, 1
          %s263 = scalar_lea.sflag [#allocation3], %s262
          %s264 = sand.u32 %s30, 1
          %s265 = smul.addr %s264, 32
          %s266 = scalar_lea.vmem [#allocation2], %s265
          %s267 = smul.u32 2, %s20
          %s269 = ssub.s32 512, 512
          %270 = vsyncadd %s263, %s269
          %s271 = smul.addr %s267, 128
          %s272 = scalar_lea.hbm %s0, %s271
          %s273 = sshll.u32 %s266, 4
          %s274 = int_to_ptr.vmem [resolvable:$true] %s273
          %279 = dma.hbm_to_vmem [thread:$0]  %s272, 512, %s274, %s263, 512, 256, 16
        $region48: #{tpu_custom_call.1} parent=43 // pred_fallthru
          _
      $region44: #{tpu_custom_call.1} parent=5 // pred_fallthru
        _
      %p280 = scmp.le.s32.totalorder 1, %s20
      %p281 = scmp.lt.s32.totalorder %s20, 3
      %p282 = pnand %p280, %p281
      %p283 = pneg %p282
      // Predicated region
      $region49: #{tpu_custom_call.1} parent=5 // pred_check
        _
      $region50: #{tpu_custom_call.1} parent=5 // pred_check_branch
        %285 = sbr.rel (%p282) target = $region52
      $region51: #{tpu_custom_call.1} parent=5 // pred_region
        %s286 = ssub.s32 %s20, 1
        %s287 = sand.u32 %s33, 1
        %s288 = scalar_lea.sflag [#allocation3], %s287
        %s289 = sand.u32 %s33, 1
        %s290 = smul.addr %s289, 32
        %s291 = scalar_lea.vmem [#allocation2], %s290
        // Predicated region
        $region53: #{tpu_custom_call.1} parent=51 // pred_check
          %p292 = pneg %p46
        $region54: #{tpu_custom_call.1} parent=51 // pred_check_branch
          %294 = sbr.rel (%p292) target = $region56
        $region55: #{tpu_custom_call.1} parent=51 // pred_region
          %295 = dma.done %s288, 512
        $region56: #{tpu_custom_call.1} parent=51 // pred_fallthru
          _
        %s296 = sand.u32 %s33, 1
        %s297 = scalar_lea.sflag [#allocation3], %s296
        %s298 = sand.u32 %s33, 1
        %s299 = smul.addr %s298, 32
        %s300 = scalar_lea.vmem [#allocation2], %s299
        %p301 = pneg %p46
        %p302 = pneg %p43
        %p303 = pneg %p67
        %p304 = pneg %p64
        %p305 = pneg %p88
        %p306 = pneg %p85
        %p307 = pneg %p109
        %p308 = pneg %p106
        %p309 = pneg %p130
        %p310 = pneg %p127
        %p311 = pneg %p151
        %p312 = pneg %p148
        %p313 = pneg %p172
        %p314 = pneg %p169
        %p315 = pneg %p193
        %p316 = pneg %p190
        %p317 = pneg %p219
        %p318 = pneg %p216
        %s319 = sand.u32 %s206, 1
        %s320 = scalar_lea.sflag [#allocation4], %s319
        %s321 = sand.u32 %s206, 1
        %s322 = smul.addr %s321, 32
        %s323 = scalar_lea.vmem [#allocation5], %s322
        %s324 = smul.u32 2, %s25
        %s325 = smul.u32 2, %s25
        %v326 = vld [vmem:[%s2] sm:$0xff]
        %v327 = vld [vmem:[%s291] sm:$0xff]
        %v328 = vld [vmem:[%s291 + $0x8] sm:$0xff]
        %v329 = vld [vmem:[%s291 + $0x10] sm:$0xff]
        %v330 = vld [vmem:[%s291 + $0x18] sm:$0xff]
        %v331 = vld [vmem:[%s3] sm:$0xff]
        %333 = vset.pattern.permute.xlu0 0
        %334 = vperm.xlu0 %333, %v331
        %v335 = vpop.permute.xlu0 %334
        %vm337 = vcmask 130048
        %v339 = vsel %vm337, %v326, 0
        %341 = vmatprep.subr.mxu0 %v328
        %342 = vmatpush1.msra.mxu0 %v327
        %343 = vmatprep.subr.mxu0 %v330
        %344 = vmatpush1.msra.mxu0 %v329
        %345 = vmatprep.subr.mxu0 0.0
        %346 = vmatpush1.msra.mxu0 0.0
        %347 = vmatprep.subr.mxu0 0.0
        %348 = vmatpush1.msra.mxu0 0.0
        %349 = vmatprep.subr.mxu0 0.0
        %350 = vmatpush1.msra.mxu0 0.0
        %351 = vmatprep.subr.mxu0 0.0
        %352 = vmatpush1.msra.mxu0 0.0
        %353 = vmatprep.subr.mxu0 0.0
        %354 = vmatpush1.msra.mxu0 0.0
        %355 = vmatprep.subr.mxu0 0.0
        %356 = vmatpush1.msra.mxu0 0.0
        %357 = vmatprep.subr.mxu0 0.0
        %358 = vmatpush1.msra.mxu0 0.0
        %359 = vmatprep.subr.mxu0 0.0
        %360 = vmatpush1.msra.mxu0 0.0
        %361 = vmatprep.subr.mxu0 0.0
        %362 = vmatpush1.msra.mxu0 0.0
        %363 = vmatprep.subr.mxu0 0.0
        %364 = vmatpush1.msra.mxu0 0.0
        %365 = vmatprep.subr.mxu0 0.0
        %366 = vmatpush1.msra.mxu0 0.0
        %367 = vmatprep.subr.mxu0 0.0
        %368 = vmatpush1.msra.mxu0 0.0
        %369 = vmatprep.subr.mxu0 0.0
        %370 = vmatpush1.msra.mxu0 0.0
        %371 = vmatprep.subr.mxu0 0.0
        %372 = vmatpush1.msra.mxu0 0.0
        %373 = vmatprep.subr.mxu0 0.0
        %374 = vmatpush1.msra.mxu0 0.0
        %375 = vmatprep.subr.mxu0 0.0
        %376 = vmatpush1.msra.mxu0 0.0
        %377 = vmatprep.subr.mxu0 0.0
        %378 = vmatpush1.msra.mxu0 0.0
        %379 = vmatprep.subr.mxu0 0.0
        %380 = vmatpush1.msra.mxu0 0.0
        %381 = vmatprep.subr.mxu0 0.0
        %382 = vmatpush1.msra.mxu0 0.0
        %383 = vmatprep.subr.mxu0 0.0
        %384 = vmatpush1.msra.mxu0 0.0
        %385 = vmatprep.subr.mxu0 0.0
        %386 = vmatpush1.msra.mxu0 0.0
        %387 = vmatprep.subr.mxu0 0.0
        %388 = vmatpush1.msra.mxu0 0.0
        %389 = vmatprep.subr.mxu0 0.0
        %390 = vmatpush1.msra.mxu0 0.0
        %391 = vmatprep.subr.mxu0 0.0
        %392 = vmatpush1.msra.mxu0 0.0
        %393 = vmatprep.subr.mxu0 0.0
        %394 = vmatpush1.msra.mxu0 0.0
        %395 = vmatprep.subr.mxu0 0.0
        %396 = vmatpush1.msra.mxu0 0.0
        %397 = vmatprep.subr.mxu0 0.0
        %398 = vmatpush1.msra.mxu0 0.0
        %399 = vmatprep.subr.mxu0 0.0
        %400 = vmatpush1.msra.mxu0 0.0
        %401 = vmatprep.subr.mxu0 0.0
        %402 = vmatpush1.msra.mxu0 0.0
        %403 = vmatprep.subr.mxu0 0.0
        %404 = vmatpush1.msra.mxu0 0.0
        %405 = vmatprep.mubr.f32.mxu0 0.0
        %406 = vmatmul.mubr.f32.gmra.mrb[0].mxu0 %v339
        %v407 = vpop.f32.mrb[0].mxu0
        %v408 = vadd.f32 %v335, %v407
        %v409 = vpop.f32.mrb[0].mxu0
        %v410 = vadd.f32 %v335, %v409
        %411 = vdwg.mxu0
        %v412 = vmax.f32 %v408, 0.0
        %v413 = vmax.f32 %v410, 0.0
        %414 = vrot.lane.b32.xlu0 %v412, 17
        %v415 = vpop.permute.xlu0 %414
        %416 = vrot.lane.b32.xlu0 %v413, 17
        %v417 = vpop.permute.xlu0 %416
        %v418 = vlaneseq
        %v419 = vand.u32 %v418, 127
        %vm420 = vcmp.lt.s32.totalorder %v419, 17
        %v421 = vsel %vm420, %v415, %v417
        %v422 = vsel %vm420, %v417, %v415
        %v423 = vld [vmem:[%s1] ss:$8 sm:$0x3]
        %v425 = vlaneseq
        %v426 = vshrl.u32 %v425, 7
        %v427 = vsub.s32 0, %v426
        %v428 = vrot.slane %v423, %v427
        %v429 = vlaneseq
        %v430 = vshrl.u32 %v429, 7
        %v431 = vsub.s32 1, %v430
        %v432 = vrot.slane %v423, %v431
        %v435 = vmul.f32 %v422, %v428
        %v436 = vmul.f32 %v421, %v432
        %437 = vrot.lane.b32.xlu0 %v412, 16
        %v438 = vpop.permute.xlu0 %437
        %439 = vrot.lane.b32.xlu0 %v413, 16
        %v440 = vpop.permute.xlu0 %439
        %vm441 = vcmp.lt.s32.totalorder %v419, 16
        %v442 = vsel %vm441, %v438, %v440
        %v443 = vsel %vm441, %v440, %v438
        %s444 = scalar_lea.vmem %s1, 1
        %v445 = vld [vmem:[%s444] ss:$8 sm:$0x3]
        %v447 = vlaneseq
        %v448 = vshrl.u32 %v447, 7
        %v449 = vsub.s32 0, %v448
        %v450 = vrot.slane %v445, %v449
        %v451 = vlaneseq
        %v452 = vshrl.u32 %v451, 7
        %v453 = vsub.s32 1, %v452
        %v454 = vrot.slane %v445, %v453
        %v457 = vmul.f32 %v443, %v450
        %v458 = vmul.f32 %v442, %v454
        %459 = vrot.lane.b32.xlu0 %v412, 15
        %v460 = vpop.permute.xlu0 %459
        %461 = vrot.lane.b32.xlu0 %v413, 15
        %v462 = vpop.permute.xlu0 %461
        %vm463 = vcmp.lt.s32.totalorder %v419, 15
        %v464 = vsel %vm463, %v460, %v462
        %v465 = vsel %vm463, %v462, %v460
        %s466 = scalar_lea.vmem %s1, 2
        %v467 = vld [vmem:[%s466] ss:$8 sm:$0x3]
        %v469 = vlaneseq
        %v470 = vshrl.u32 %v469, 7
        %v471 = vsub.s32 0, %v470
        %v472 = vrot.slane %v467, %v471
        %v473 = vlaneseq
        %v474 = vshrl.u32 %v473, 7
        %v475 = vsub.s32 1, %v474
        %v476 = vrot.slane %v467, %v475
        %v479 = vmul.f32 %v465, %v472
        %v480 = vmul.f32 %v464, %v476
        %481 = vrot.lane.b32.xlu0 %v412, 1
        %v482 = vpop.permute.xlu0 %481
        %483 = vrot.lane.b32.xlu0 %v413, 1
        %v484 = vpop.permute.xlu0 %483
        %vm485 = vcmp.lt.s32.totalorder %v419, 1
        %v486 = vsel %vm485, %v482, %v484
        %v487 = vsel %vm485, %v484, %v482
        %s488 = scalar_lea.vmem %s1, 3
        %v489 = vld [vmem:[%s488] ss:$8 sm:$0x3]
        %v491 = vlaneseq
        %v492 = vshrl.u32 %v491, 7
        %v493 = vsub.s32 0, %v492
        %v494 = vrot.slane %v489, %v493
        %v495 = vlaneseq
        %v496 = vshrl.u32 %v495, 7
        %v497 = vsub.s32 1, %v496
        %v498 = vrot.slane %v489, %v497
        %v501 = vmul.f32 %v487, %v494
        %v502 = vmul.f32 %v486, %v498
        %s503 = scalar_lea.vmem %s1, 4
        %v504 = vld [vmem:[%s503] ss:$8 sm:$0x3]
        %v506 = vlaneseq
        %v507 = vshrl.u32 %v506, 7
        %v508 = vsub.s32 0, %v507
        %v509 = vrot.slane %v504, %v508
        %v510 = vlaneseq
        %v511 = vshrl.u32 %v510, 7
        %v512 = vsub.s32 1, %v511
        %v513 = vrot.slane %v504, %v512
        %v516 = vmul.f32 %v412, %v509
        %v517 = vmul.f32 %v413, %v513
        %518 = vrot.lane.b32.xlu0 %v412, 127
        %v519 = vpop.permute.xlu0 %518
        %520 = vrot.lane.b32.xlu0 %v413, 127
        %v521 = vpop.permute.xlu0 %520
        %vm522 = vcmp.lt.s32.totalorder %v419, 127
        %v523 = vsel %vm522, %v519, %v521
        %v524 = vsel %vm522, %v521, %v519
        %s525 = scalar_lea.vmem %s1, 5
        %v526 = vld [vmem:[%s525] ss:$8 sm:$0x3]
        %v528 = vlaneseq
        %v529 = vshrl.u32 %v528, 7
        %v530 = vsub.s32 0, %v529
        %v531 = vrot.slane %v526, %v530
        %v532 = vlaneseq
        %v533 = vshrl.u32 %v532, 7
        %v534 = vsub.s32 1, %v533
        %v535 = vrot.slane %v526, %v534
        %v538 = vmul.f32 %v523, %v531
        %v539 = vmul.f32 %v524, %v535
        %540 = vrot.lane.b32.xlu0 %v412, 113
        %v541 = vpop.permute.xlu0 %540
        %542 = vrot.lane.b32.xlu0 %v413, 113
        %v543 = vpop.permute.xlu0 %542
        %vm544 = vcmp.lt.s32.totalorder %v419, 113
        %v545 = vsel %vm544, %v541, %v543
        %v546 = vsel %vm544, %v543, %v541
        %s547 = scalar_lea.vmem %s1, 6
        %v548 = vld [vmem:[%s547] ss:$8 sm:$0x3]
        %v550 = vlaneseq
        %v551 = vshrl.u32 %v550, 7
        %v552 = vsub.s32 0, %v551
        %v553 = vrot.slane %v548, %v552
        %v554 = vlaneseq
        %v555 = vshrl.u32 %v554, 7
        %v556 = vsub.s32 1, %v555
        %v557 = vrot.slane %v548, %v556
        %v560 = vmul.f32 %v545, %v553
        %v561 = vmul.f32 %v546, %v557
        %562 = vrot.lane.b32.xlu0 %v412, 112
        %v563 = vpop.permute.xlu0 %562
        %564 = vrot.lane.b32.xlu0 %v413, 112
        %v565 = vpop.permute.xlu0 %564
        %vm566 = vcmp.lt.s32.totalorder %v419, 112
        %v567 = vsel %vm566, %v563, %v565
        %v568 = vsel %vm566, %v565, %v563
        %s569 = scalar_lea.vmem %s1, 7
        %v570 = vld [vmem:[%s569] ss:$8 sm:$0x3]
        %v572 = vlaneseq
        %v573 = vshrl.u32 %v572, 7
        %v574 = vsub.s32 0, %v573
        %v575 = vrot.slane %v570, %v574
        %v576 = vlaneseq
        %v577 = vshrl.u32 %v576, 7
        %v578 = vsub.s32 1, %v577
        %v579 = vrot.slane %v570, %v578
        %v582 = vmul.f32 %v567, %v575
        %v583 = vmul.f32 %v568, %v579
        %584 = vrot.lane.b32.xlu0 %v412, 111
        %v585 = vpop.permute.xlu0 %584
        %586 = vrot.lane.b32.xlu0 %v413, 111
        %v587 = vpop.permute.xlu0 %586
        %vm588 = vcmp.lt.s32.totalorder %v419, 111
        %v589 = vsel %vm588, %v585, %v587
        %v590 = vsel %vm588, %v587, %v585
        %s591 = scalar_lea.vmem %s1, 16
        %v592 = vld [vmem:[%s591] ss:$8 sm:$0x3]
        %v594 = vlaneseq
        %v595 = vshrl.u32 %v594, 7
        %v596 = vsub.s32 0, %v595
        %v597 = vrot.slane %v592, %v596
        %v598 = vlaneseq
        %v599 = vshrl.u32 %v598, 7
        %v600 = vsub.s32 1, %v599
        %v601 = vrot.slane %v592, %v600
        %v604 = vmul.f32 %v589, %v597
        %v605 = vmul.f32 %v590, %v601
        %v606 = vld [vmem:[%s4] sm:$0xff]
        %v607 = vld [vmem:[%s5] sm:$0xff]
        %609 = vset.pattern.permute.xlu0 0
        %610 = vperm.xlu0 %609, %v607
        %v611 = vpop.permute.xlu0 %610
        %vm613 = vcmask 588800
        %v615 = vsel %vm613, %v606, 0
        %617 = vmatprep.subr.mxu0 %v436
        %618 = vmatpush1.msra.mxu0 %v435
        %619 = vmatprep.subr.mxu0 %v458
        %620 = vmatpush1.msra.mxu0 %v457
        %621 = vmatprep.subr.mxu0 %v480
        %622 = vmatpush1.msra.mxu0 %v479
        %623 = vmatprep.subr.mxu0 %v502
        %624 = vmatpush1.msra.mxu0 %v501
        %625 = vmatprep.subr.mxu0 %v517
        %626 = vmatpush1.msra.mxu0 %v516
        %627 = vmatprep.subr.mxu0 %v539
        %628 = vmatpush1.msra.mxu0 %v538
        %629 = vmatprep.subr.mxu0 %v561
        %630 = vmatpush1.msra.mxu0 %v560
        %631 = vmatprep.subr.mxu0 %v583
        %632 = vmatpush1.msra.mxu0 %v582
        %633 = vmatprep.subr.mxu0 %v605
        %634 = vmatpush1.msra.mxu0 %v604
        %635 = vmatprep.subr.mxu0 0.0
        %636 = vmatpush1.msra.mxu0 0.0
        %637 = vmatprep.subr.mxu0 0.0
        %638 = vmatpush1.msra.mxu0 0.0
        %639 = vmatprep.subr.mxu0 0.0
        %640 = vmatpush1.msra.mxu0 0.0
        %641 = vmatprep.subr.mxu0 0.0
        %642 = vmatpush1.msra.mxu0 0.0
        %643 = vmatprep.subr.mxu0 0.0
        %644 = vmatpush1.msra.mxu0 0.0
        %645 = vmatprep.subr.mxu0 0.0
        %646 = vmatpush1.msra.mxu0 0.0
        %647 = vmatprep.subr.mxu0 0.0
        %648 = vmatpush1.msra.mxu0 0.0
        %649 = vmatprep.subr.mxu0 0.0
        %650 = vmatpush1.msra.mxu0 0.0
        %651 = vmatprep.subr.mxu0 0.0
        %652 = vmatpush1.msra.mxu0 0.0
        %653 = vmatprep.subr.mxu0 0.0
        %654 = vmatpush1.msra.mxu0 0.0
        %655 = vmatprep.subr.mxu0 0.0
        %656 = vmatpush1.msra.mxu0 0.0
        %657 = vmatprep.subr.mxu0 0.0
        %658 = vmatpush1.msra.mxu0 0.0
        %659 = vmatprep.subr.mxu0 0.0
        %660 = vmatpush1.msra.mxu0 0.0
        %661 = vmatprep.subr.mxu0 0.0
        %662 = vmatpush1.msra.mxu0 0.0
        %663 = vmatprep.subr.mxu0 0.0
        %664 = vmatpush1.msra.mxu0 0.0
        %665 = vmatprep.subr.mxu0 0.0
        %666 = vmatpush1.msra.mxu0 0.0
        %667 = vmatprep.subr.mxu0 0.0
        %668 = vmatpush1.msra.mxu0 0.0
        %669 = vmatprep.subr.mxu0 0.0
        %670 = vmatpush1.msra.mxu0 0.0
        %671 = vmatprep.subr.mxu0 0.0
        %672 = vmatpush1.msra.mxu0 0.0
        %673 = vmatprep.subr.mxu0 0.0
        %674 = vmatpush1.msra.mxu0 0.0
        %675 = vmatprep.subr.mxu0 0.0
        %676 = vmatpush1.msra.mxu0 0.0
        %677 = vmatprep.subr.mxu0 0.0
        %678 = vmatpush1.msra.mxu0 0.0
        %679 = vmatprep.subr.mxu0 0.0
        %680 = vmatpush1.msra.mxu0 0.0
        %681 = vmatprep.mubr.f32.mxu0 0.0
        %682 = vmatmul.mubr.f32.gmra.mrb[0].mxu0 %v615
        %v683 = vpop.f32.mrb[0].mxu0
        %v684 = vadd.f32 %v611, %v683
        %v685 = vpop.f32.mrb[0].mxu0
        %v686 = vadd.f32 %v611, %v685
        %687 = vdwg.mxu0
        %v688 = vmax.f32 %v684, 0.0
        %v689 = vmax.f32 %v686, 0.0
        %v690 = vld [vmem:[%s6] sm:$0xff]
        %v691 = vld [vmem:[%s6 + $0x8] sm:$0xff]
        %v692 = vld [vmem:[%s7] sm:$0xff]
        %v693 = vld [vmem:[%s7 + $0x8] sm:$0xff]
        %695 = vset.pattern.permute.xlu0 0
        %696 = vperm.xlu0 %695, %v692
        %v697 = vpop.permute.xlu0 %696
        %700 = vset.pattern.permute.xlu0 0
        %701 = vperm.xlu0 %700, %v693
        %v702 = vpop.permute.xlu0 %701
        %vm704 = vcmask 64512
        %v706 = vsel %vm704, %v690, 0
        %v709 = vsel %vm704, %v691, 0
        %711 = vmatprep.subr.mxu0 %v689
        %712 = vmatpush1.msra.mxu0 %v688
        %713 = vmatprep.subr.mxu0 0.0
        %714 = vmatpush1.msra.mxu0 0.0
        %715 = vmatprep.subr.mxu0 0.0
        %716 = vmatpush1.msra.mxu0 0.0
        %717 = vmatprep.subr.mxu0 0.0
        %718 = vmatpush1.msra.mxu0 0.0
        %719 = vmatprep.subr.mxu0 0.0
        %720 = vmatpush1.msra.mxu0 0.0
        %721 = vmatprep.subr.mxu0 0.0
        %722 = vmatpush1.msra.mxu0 0.0
        %723 = vmatprep.subr.mxu0 0.0
        %724 = vmatpush1.msra.mxu0 0.0
        %725 = vmatprep.subr.mxu0 0.0
        %726 = vmatpush1.msra.mxu0 0.0
        %727 = vmatprep.subr.mxu0 0.0
        %728 = vmatpush1.msra.mxu0 0.0
        %729 = vmatprep.subr.mxu0 0.0
        %730 = vmatpush1.msra.mxu0 0.0
        %731 = vmatprep.subr.mxu0 0.0
        %732 = vmatpush1.msra.mxu0 0.0
        %733 = vmatprep.subr.mxu0 0.0
        %734 = vmatpush1.msra.mxu0 0.0
        %735 = vmatprep.subr.mxu0 0.0
        %736 = vmatpush1.msra.mxu0 0.0
        %737 = vmatprep.subr.mxu0 0.0
        %738 = vmatpush1.msra.mxu0 0.0
        %739 = vmatprep.subr.mxu0 0.0
        %740 = vmatpush1.msra.mxu0 0.0
        %741 = vmatprep.subr.mxu0 0.0
        %742 = vmatpush1.msra.mxu0 0.0
        %743 = vmatprep.subr.mxu0 0.0
        %744 = vmatpush1.msra.mxu0 0.0
        %745 = vmatprep.subr.mxu0 0.0
        %746 = vmatpush1.msra.mxu0 0.0
        %747 = vmatprep.subr.mxu0 0.0
        %748 = vmatpush1.msra.mxu0 0.0
        %749 = vmatprep.subr.mxu0 0.0
        %750 = vmatpush1.msra.mxu0 0.0
        %751 = vmatprep.subr.mxu0 0.0
        %752 = vmatpush1.msra.mxu0 0.0
        %753 = vmatprep.subr.mxu0 0.0
        %754 = vmatpush1.msra.mxu0 0.0
        %755 = vmatprep.subr.mxu0 0.0
        %756 = vmatpush1.msra.mxu0 0.0
        %757 = vmatprep.subr.mxu0 0.0
        %758 = vmatpush1.msra.mxu0 0.0
        %759 = vmatprep.subr.mxu0 0.0
        %760 = vmatpush1.msra.mxu0 0.0
        %761 = vmatprep.subr.mxu0 0.0
        %762 = vmatpush1.msra.mxu0 0.0
        %763 = vmatprep.subr.mxu0 0.0
        %764 = vmatpush1.msra.mxu0 0.0
        %765 = vmatprep.subr.mxu0 0.0
        %766 = vmatpush1.msra.mxu0 0.0
        %767 = vmatprep.subr.mxu0 0.0
        %768 = vmatpush1.msra.mxu0 0.0
        %769 = vmatprep.subr.mxu0 0.0
        %770 = vmatpush1.msra.mxu0 0.0
        %771 = vmatprep.subr.mxu0 0.0
        %772 = vmatpush1.msra.mxu0 0.0
        %773 = vmatprep.subr.mxu0 0.0
        %774 = vmatpush1.msra.mxu0 0.0
        %775 = vmatprep.mubr.f32.mxu0 0.0
        %776 = vmatmul.mubr.f32.gmra.mrb[0].mxu0 %v706
        %v777 = vpop.f32.mrb[0].mxu0
        %v778 = vadd.f32 %v697, %v777
        %v779 = vpop.f32.mrb[0].mxu0
        %v780 = vadd.f32 %v697, %v779
        %781 = vmatprep.mubr.f32.mxu0 0.0
        %782 = vmatmul.mubr.f32.gmra.mrb[0].mxu0 %v709
        %v783 = vpop.f32.mrb[0].mxu0
        %v784 = vadd.f32 %v702, %v783
        %v785 = vpop.f32.mrb[0].mxu0
        %v786 = vadd.f32 %v702, %v785
        %787 = vdwg.mxu0
        %v788 = vadd.f32 %v778, %v327
        %v789 = vadd.f32 %v780, %v328
        %v790 = vadd.f32 %v784, %v329
        %v791 = vadd.f32 %v786, %v330
        %v792 = vmax.f32 %v788, 0.0
        %v793 = vmax.f32 %v789, 0.0
        %v794 = vmax.f32 %v790, 0.0
        %v795 = vmax.f32 %v791, 0.0
        %796 = vst [vmem:[%s323] sm:$0xff] %v792
        %797 = vst [vmem:[%s323 + $0x8] sm:$0xff] %v793
        %798 = vst [vmem:[%s323 + $0x10] sm:$0xff] %v794
        %799 = vst [vmem:[%s323 + $0x18] sm:$0xff] %v795
        %s800 = sand.u32 %s206, 1
        %s801 = scalar_lea.sflag [#allocation4], %s800
        %s802 = sand.u32 %s206, 1
        %s803 = smul.addr %s802, 32
        %s804 = scalar_lea.vmem [#allocation5], %s803
        // Predicated region
        $region57: #{tpu_custom_call.1} parent=51 // pred_check
          %p805 = pneg %p216
        $region58: #{tpu_custom_call.1} parent=51 // pred_check_branch
          %807 = sbr.rel (%p805) target = $region60
        $region59: #{tpu_custom_call.1} parent=51 // pred_region
          %s808 = smul.u32 2, %s25
          %s810 = ssub.s32 512, 512
          %811 = vsyncadd %s801, %s810
          %s812 = smul.addr %s808, 128
          %s813 = scalar_lea.hbm %s8, %s812
          %s814 = sshll.u32 %s804, 4
          %s815 = int_to_ptr.vmem [resolvable:$true] %s814
          %820 = dma.vmem_to_hbm [thread:$0]  %s815, 512, %s813, %s801, 256, 512, 16
        $region60: #{tpu_custom_call.1} parent=51 // pred_fallthru
          _
      $region52: #{tpu_custom_call.1} parent=5 // pred_fallthru
        _
      %p821 = scmp.le.s32.totalorder 2, %s20
      // Predicated region
      $region61: #{tpu_custom_call.1} parent=5 // pred_check
        %p822 = pneg %p821
      $region62: #{tpu_custom_call.1} parent=5 // pred_check_branch
        %824 = sbr.rel (%p822) target = $region64
      $region63: #{tpu_custom_call.1} parent=5 // pred_region
        %s825 = ssub.s32 %s20, 2
        // Predicated region
        $region65: #{tpu_custom_call.1} parent=63 // pred_check
          %p826 = pneg %p222
        $region66: #{tpu_custom_call.1} parent=63 // pred_check_branch
          %828 = sbr.rel (%p826) target = $region68
        $region67: #{tpu_custom_call.1} parent=63 // pred_region
          %s829 = sand.u32 %s207, 1
          %s830 = scalar_lea.sflag [#allocation4], %s829
          %s831 = sand.u32 %s207, 1
          %s832 = smul.addr %s831, 32
          %s833 = scalar_lea.vmem [#allocation5], %s832
          %834 = dma.done %s830, 512
        $region68: #{tpu_custom_call.1} parent=63 // pred_fallthru
          _
      $region64: #{tpu_custom_call.1} parent=5 // pred_fallthru
        _
    $region6: #{tpu_custom_call.1} parent=1 // loop_footer
      %s24 = sadd.s32 1, %s20
    $region7: #{tpu_custom_call.1} parent=1 // loop_footer_branch
      %19 = sbr.rel target = $region3
    $region8: #{tpu_custom_call.1} parent=1 // loop_exit
      _
    %835 = vsyncpa [#allocation3], 1
    %s836 = scalar_lea.sflag [#allocation3], 1
    %837 = vsyncpa %s836, 1
    %838 = vsyncpa [#allocation4], 1
    %s839 = scalar_lea.sflag [#allocation4], 1
    %840 = vsyncpa %s839, 1

</llo_original>
